<compile_context>
chip_gen: v5e
topology: v5e:2x2
jax: 0.10.0
libtpu: 0.0.40
codegen_flags: <defaults>
</compile_context>

<pallas_src>
import jax
import jax.numpy as jnp
from jax import lax
from jax.experimental import pallas as pl
from jax.experimental.pallas import tpu as pltpu


def _make_kernel(bb, C, S):
    """Kernel processing `bb` batch elements packed along the lane axis."""

    def kernel(qkv_ref, w_ref, b_ref, o_ref):
        # qkv_ref: (1, 3C, bb*S) channels-first, batches side-by-side in lanes.
        # w_ref:   (3C, 3C) block-diagonal fused projection weight (Q pre-scaled).
        # b_ref:   (3C, 1) fused projection bias (Q bias pre-scaled).
        # o_ref:   (1, C, bb*S).
        # Loop-invariant loads / broadcasts hoisted out of the batch loop.
        w = w_ref[...]                                                 # (3C, 3C)
        b = b_ref[...]                                                 # (3C, 1)
        x = qkv_ref[0]                                                 # (3C, bb*S)

        # One fused projection matmul + one bias broadcast for the whole step.
        qkv = jnp.dot(w, x, preferred_element_type=jnp.float32) + b   # (3C, bb*S)
        Q = qkv[:C]            # already scaled by 1/sqrt(C) via the weights
        K = qkv[C:2 * C]
        V = qkv[2 * C:]

        outs = []
        for i in range(bb):    # static unroll; bb is kept small by the wrapper
            sl = slice(i * S, (i + 1) * S)
            q_i, k_i, v_i = Q[:, sl], K[:, sl], V[:, sl]

            # s[k, q] = <K[:,k], Q[:,q]>  (contraction over channels, no
            # explicit transpose materialized; scale already folded in).
            s = lax.dot_general(k_i, q_i, (((0,), (0,)), ((), ())),
                                preferred_element_type=jnp.float32)    # (S_k, S_q)

            # Numerically stable softmax over the key axis (axis 0);
            # max / sum land directly as (1, S_q) lane rows.
            m = jnp.max(s, axis=0, keepdims=True)                      # (1, S_q)
            p = jnp.exp(s - m)
            l = jnp.sum(p, axis=0, keepdims=True)                      # (1, S_q)

            # out[c, q] = sum_k V[c, k] * p[k, q]  — plain MXU matmul.
            o = jnp.dot(v_i, p, preferred_element_type=jnp.float32)    # (C, S_q)

            # Normalize AFTER the PV matmul (C*S mults, not S*S).
            # EUP approx reciprocal + one Newton step ~ f32 accuracy.
            inv = pl.reciprocal(l, approx=True)
            inv = inv * (2.0 - l * inv)
            outs.append(o * inv)

        out = outs[0] if bb == 1 else jnp.concatenate(outs, axis=-1)   # (C, bb*S)
        o_ref[0] = out.astype(o_ref.dtype)

    return kernel


def _default_batch_block(B):
    """Grid policy: collapse on single-TC v5e/v6e; 2 parallel steps on v7x."""
    kind = ""
    try:
        kind = jax.devices()[0].device_kind.lower()
    except Exception:
        pass
    bb = B
    if "v7" in kind and B % 2 == 0:
        bb = B // 2          # one grid step per TensorCore
    # Bound the static per-step unroll (vreg pressure); use lax.fori_loop
    # instead of the Python unroll if bb must grow far beyond this.
    while bb > 4 and bb % 2 == 0:
        bb //= 2
    return bb


def cross_attention_pallas(query, key, value, params, *, batch_block=None):
    """query/key/value: (B, C, H, W) float32 (PyTorch NCHW convention).

    batch_block: batch elements per grid step (None -> device-aware default).
    """
    B, C, H, W = query.shape
    S = H * W
    bb = _default_batch_block(B) if batch_block is None else batch_block
    assert B % bb == 0, "batch_block must divide B"
    nb = B // bb

    scale = 1.0 / (float(C) ** 0.5)

    # NCHW -> (B, C, S) is a contiguous reshape; concatenate q/k/v ONCE along
    # the channel axis so the kernel gets a single input (one DMA per step).
    qkv = jnp.concatenate([query.reshape(B, C, S),
                           key.reshape(B, C, S),
                           value.reshape(B, C, S)], axis=1)            # (B, 3C, S)
    # Pack the per-step batch into the lane axis: tile last dim = bb*S, so
    # with bb>=2 the output store is lane-dense (>=128 lanes, unmasked vst)
    # and the projection runs as ONE matmul over all bb elements.
    qkv = (qkv.reshape(nb, bb, 3 * C, S)
              .transpose(0, 2, 1, 3)
              .reshape(nb, 3 * C, bb * S))                             # (nb, 3C, bb*S)

    # 1x1-conv weights (C_out, C_in, 1, 1) -> matrices; fold the 1/sqrt(C)
    # attention scale into the Q projection weight AND bias.
    wq = params["wq"][:, :, 0, 0] * scale
    wk = params["wk"][:, :, 0, 0]
    wv = params["wv"][:, :, 0, 0]
    z = jnp.zeros((C, C), query.dtype)
    # NOTE: fine at C=32; at C>=128 prefer per-slab matmuls and build this
    # block-diagonal weight once (jit constant) instead of per call.
    w_bd = jnp.block([[wq, z, z],
                      [z, wk, z],
                      [z, z, wv]])                                     # (3C, 3C)
    b_bd = jnp.concatenate([params["bq"] * scale,
                            params["bk"],
                            params["bv"]]).reshape(3 * C, 1)           # (3C, 1)

    kernel = _make_kernel(bb, C, S)
    qkv_spec = pl.BlockSpec((1, 3 * C, bb * S), lambda g: (g, 0, 0))
    out_spec = pl.BlockSpec((1, C, bb * S), lambda g: (g, 0, 0))
    w_spec = pl.BlockSpec((3 * C, 3 * C), lambda g: (0, 0))
    b_spec = pl.BlockSpec((3 * C, 1), lambda g: (0, 0))

    out_p = pl.pallas_call(
        kernel,
        out_shape=jax.ShapeDtypeStruct((nb, C, bb * S), query.dtype),
        grid_spec=pltpu.PrefetchScalarGridSpec(
            num_scalar_prefetch=0,
            grid=(nb,),
            in_specs=[qkv_spec, w_spec, b_spec],
            out_specs=out_spec,
        ),
        compiler_params=pltpu.CompilerParams(
            dimension_semantics=("parallel",)),
    )(qkv, w_bd, b_bd)

    # Unpack lanes -> batch and reshape back to NCHW (kB-scale, negligible).
    out = (out_p.reshape(nb, C, bb, S)
                .transpose(0, 2, 1, 3)
                .reshape(B, C, H, W))
    return out


def _reference(query, key, value, params):
    """Pure-JAX reference mirroring the PyTorch forward (for validation)."""
    B, C, H, W = query.shape
    S = H * W

    def proj(x, w, b):
        xt = jnp.transpose(x.reshape(B, C, S), (0, 2, 1))          # (B, S, C)
        return xt @ w[:, :, 0, 0].T + b[None, None, :]

    Q = proj(query, params["wq"], params["bq"])
    K = proj(key, params["wk"], params["bk"])
    V = proj(value, params["wv"], params["bv"])
    s = (Q @ jnp.transpose(K, (0, 2, 1))) / (C ** 0.5)
    p = jax.nn.softmax(s, axis=-1)
    o = p @ V
    return jnp.transpose(o, (0, 2, 1)).reshape(B, C, H, W)


if __name__ == "__main__":
    B, C, H, W = 2, 32, 8, 8  # embed_dim = 32, S = 64
    key0 = jax.random.PRNGKey(0)
    ks = jax.random.split(key0, 9)

    query = jax.random.normal(ks[0], (B, C, H, W), jnp.float32)
    key_in = jax.random.normal(ks[1], (B, C, H, W), jnp.float32)
    value = jax.random.normal(ks[2], (B, C, H, W), jnp.float32)

    # Deterministic parameters (Conv2d 1x1 weight shape: (C_out, C_in, 1, 1)).
    init_scale = 1.0 / (C ** 0.5)
    params = {
        "wq": jax.random.normal(ks[3], (C, C, 1, 1), jnp.float32) * init_scale,
        "wk": jax.random.normal(ks[4], (C, C, 1, 1), jnp.float32) * init_scale,
        "wv": jax.random.normal(ks[5], (C, C, 1, 1), jnp.float32) * init_scale,
        "bq": jax.random.normal(ks[6], (C,), jnp.float32) * 0.01,
        "bk": jax.random.normal(ks[7], (C,), jnp.float32) * 0.01,
        "bv": jax.random.normal(ks[8], (C,), jnp.float32) * 0.01,
    }

    ref = _reference(query, key_in, value, params)

    # Path 1: device-aware default (collapsed grid + lane-dense 128-wide
    # output on single-TC chips; 2 parallel steps on v7x).
    out = cross_attention_pallas(query, key_in, value, params)
    jax.block_until_ready(out)
    assert out.shape == (B, C, H, W)
    assert jnp.allclose(out, ref, atol=1e-4, rtol=1e-4), "mismatch (default grid)"

    # Path 2: explicit per-batch grid (v7x-style 2-way parallel split).
    out2 = cross_attention_pallas(query, key_in, value, params, batch_block=1)
    jax.block_until_ready(out2)
    assert jnp.allclose(out2, ref, atol=1e-4, rtol=1e-4), "mismatch (per-batch grid)"

    # Path 3: explicit fully collapsed grid.
    out3 = cross_attention_pallas(query, key_in, value, params, batch_block=B)
    jax.block_until_ready(out3)
    assert jnp.allclose(out3, ref, atol=1e-4, rtol=1e-4), "mismatch (collapsed grid)"

    print("KERNEL_OK")
</pallas_src>

<mosaic_0001>
module attributes {stable_mosaic.version = 11 : i64} {
  func.func @kernel(%arg0: i32, %arg1: memref<1x96x128xf32, #tpu.memory_space<vmem>>, %arg2: memref<96x96xf32, #tpu.memory_space<vmem>>, %arg3: memref<96x1xf32, #tpu.memory_space<vmem>>, %arg4: memref<1x32x128xf32, #tpu.memory_space<vmem>>) attributes {dimension_semantics = [#tpu.dimension_semantics<parallel>], iteration_bounds = array<i64: 1>, scalar_prefetch = 0 : i64, scratch_operands = 0 : i64, tpu.core_type = #tpu.core_type<tc>, window_params = [{transform_indices = @transform_0, window_bounds = array<i64: 1, 96, 128>}, {pipeline_mode = #tpu.pipeline_mode<synchronous>, transform_indices = @transform_1, window_bounds = array<i64: 96, 96>}, {pipeline_mode = #tpu.pipeline_mode<synchronous>, transform_indices = @transform_2, window_bounds = array<i64: 96, 1>}, {transform_indices = @transform_3, window_bounds = array<i64: 1, 32, 128>}]} {
    %c0 = arith.constant 0 : index
    %c0_0 = arith.constant 0 : index
    %0 = vector.load %arg2[%c0, %c0_0] : memref<96x96xf32, #tpu.memory_space<vmem>>, vector<96x96xf32>
    %c0_1 = arith.constant 0 : index
    %c0_2 = arith.constant 0 : index
    %1 = vector.load %arg3[%c0_1, %c0_2] : memref<96x1xf32, #tpu.memory_space<vmem>>, vector<96x1xf32>
    %c0_3 = arith.constant 0 : index
    %c0_4 = arith.constant 0 : index
    %c0_5 = arith.constant 0 : index
    %2 = vector.load %arg1[%c0_3, %c0_4, %c0_5] : memref<1x96x128xf32, #tpu.memory_space<vmem>>, vector<1x96x128xf32>
    %3 = vector.shape_cast %2 : vector<1x96x128xf32> to vector<96x128xf32>
    %cst = arith.constant dense<0.000000e+00> : vector<96x128xf32>
    %4 = tpu.matmul %0, %3, %cst {dimension_numbers = #tpu.dot_dimension_numbers<[1], [0], [0], [1], [0, 0, 1, 1], [], []>} : vector<96x96xf32>, vector<96x128xf32>, vector<96x128xf32> -> vector<96x128xf32>
    %5 = vector.broadcast %1 : vector<96x1xf32> to vector<96x128xf32>
    %6 = arith.addf %4, %5 : vector<96x128xf32>
    %7 = vector.extract_strided_slice %6 {offsets = [0, 0], sizes = [32, 128], strides = [1, 1]} : vector<96x128xf32> to vector<32x128xf32>
    %8 = vector.extract_strided_slice %6 {offsets = [32, 0], sizes = [32, 128], strides = [1, 1]} : vector<96x128xf32> to vector<32x128xf32>
    %9 = vector.extract_strided_slice %6 {offsets = [64, 0], sizes = [32, 128], strides = [1, 1]} : vector<96x128xf32> to vector<32x128xf32>
    %10 = vector.extract_strided_slice %7 {offsets = [0, 0], sizes = [32, 64], strides = [1, 1]} : vector<32x128xf32> to vector<32x64xf32>
    %11 = vector.extract_strided_slice %8 {offsets = [0, 0], sizes = [32, 64], strides = [1, 1]} : vector<32x128xf32> to vector<32x64xf32>
    %12 = vector.extract_strided_slice %9 {offsets = [0, 0], sizes = [32, 64], strides = [1, 1]} : vector<32x128xf32> to vector<32x64xf32>
    %cst_6 = arith.constant dense<0.000000e+00> : vector<64x64xf32>
    %13 = tpu.matmul %11, %10, %cst_6 {dimension_numbers = #tpu.dot_dimension_numbers<[0], [0], [1], [1], [0, 1, 1, 1], [], []>} : vector<32x64xf32>, vector<32x64xf32>, vector<64x64xf32> -> vector<64x64xf32>
    %cst_7 = arith.constant dense<0xFF800000> : vector<64xf32>
    %14 = vector.multi_reduction <maximumf>, %13, %cst_7 [0] : vector<64x64xf32> to vector<64xf32>
    %15 = vector.shape_cast %14 : vector<64xf32> to vector<1x64xf32>
    %16 = vector.broadcast %15 : vector<1x64xf32> to vector<64x64xf32>
    %17 = arith.subf %13, %16 : vector<64x64xf32>
    %18 = math.exp %17 : vector<64x64xf32>
    %cst_8 = arith.constant dense<0.000000e+00> : vector<64xf32>
    %19 = vector.multi_reduction <add>, %18, %cst_8 [0] : vector<64x64xf32> to vector<64xf32>
    %20 = vector.shape_cast %19 : vector<64xf32> to vector<1x64xf32>
    %cst_9 = arith.constant dense<0.000000e+00> : vector<32x64xf32>
    %21 = tpu.matmul %12, %18, %cst_9 {dimension_numbers = #tpu.dot_dimension_numbers<[1], [0], [0], [1], [0, 0, 1, 1], [], []>} : vector<32x64xf32>, vector<64x64xf32>, vector<32x64xf32> -> vector<32x64xf32>
    %22 = tpu.reciprocal %20 {approx = true} : vector<1x64xf32> -> vector<1x64xf32>
    %23 = arith.mulf %20, %22 : vector<1x64xf32>
    %cst_10 = arith.constant 2.000000e+00 : f32
    %24 = vector.broadcast %cst_10 : f32 to vector<1x64xf32>
    %25 = arith.subf %24, %23 : vector<1x64xf32>
    %26 = arith.mulf %22, %25 : vector<1x64xf32>
    %27 = vector.broadcast %26 : vector<1x64xf32> to vector<32x64xf32>
    %28 = arith.mulf %21, %27 : vector<32x64xf32>
    %29 = vector.extract_strided_slice %7 {offsets = [0, 64], sizes = [32, 64], strides = [1, 1]} : vector<32x128xf32> to vector<32x64xf32>
    %30 = vector.extract_strided_slice %8 {offsets = [0, 64], sizes = [32, 64], strides = [1, 1]} : vector<32x128xf32> to vector<32x64xf32>
    %31 = vector.extract_strided_slice %9 {offsets = [0, 64], sizes = [32, 64], strides = [1, 1]} : vector<32x128xf32> to vector<32x64xf32>
    %cst_11 = arith.constant dense<0.000000e+00> : vector<64x64xf32>
    %32 = tpu.matmul %30, %29, %cst_11 {dimension_numbers = #tpu.dot_dimension_numbers<[0], [0], [1], [1], [0, 1, 1, 1], [], []>} : vector<32x64xf32>, vector<32x64xf32>, vector<64x64xf32> -> vector<64x64xf32>
    %cst_12 = arith.constant dense<0xFF800000> : vector<64xf32>
    %33 = vector.multi_reduction <maximumf>, %32, %cst_12 [0] : vector<64x64xf32> to vector<64xf32>
    %34 = vector.shape_cast %33 : vector<64xf32> to vector<1x64xf32>
    %35 = vector.broadcast %34 : vector<1x64xf32> to vector<64x64xf32>
    %36 = arith.subf %32, %35 : vector<64x64xf32>
    %37 = math.exp %36 : vector<64x64xf32>
    %cst_13 = arith.constant dense<0.000000e+00> : vector<64xf32>
    %38 = vector.multi_reduction <add>, %37, %cst_13 [0] : vector<64x64xf32> to vector<64xf32>
    %39 = vector.shape_cast %38 : vector<64xf32> to vector<1x64xf32>
    %cst_14 = arith.constant dense<0.000000e+00> : vector<32x64xf32>
    %40 = tpu.matmul %31, %37, %cst_14 {dimension_numbers = #tpu.dot_dimension_numbers<[1], [0], [0], [1], [0, 0, 1, 1], [], []>} : vector<32x64xf32>, vector<64x64xf32>, vector<32x64xf32> -> vector<32x64xf32>
    %41 = tpu.reciprocal %39 {approx = true} : vector<1x64xf32> -> vector<1x64xf32>
    %42 = arith.mulf %39, %41 : vector<1x64xf32>
    %cst_15 = arith.constant 2.000000e+00 : f32
    %43 = vector.broadcast %cst_15 : f32 to vector<1x64xf32>
    %44 = arith.subf %43, %42 : vector<1x64xf32>
    %45 = arith.mulf %41, %44 : vector<1x64xf32>
    %46 = vector.broadcast %45 : vector<1x64xf32> to vector<32x64xf32>
    %47 = arith.mulf %40, %46 : vector<32x64xf32>
    %48 = tpu.concatenate %28, %47 in 1 : vector<32x64xf32>, vector<32x64xf32> -> vector<32x128xf32>
    %c0_16 = arith.constant 0 : index
    %c0_17 = arith.constant 0 : index
    %c0_18 = arith.constant 0 : index
    %49 = vector.load %arg4[%c0_16, %c0_17, %c0_18] : memref<1x32x128xf32, #tpu.memory_space<vmem>>, vector<1x32x128xf32>
    %50 = vector.shape_cast %49 : vector<1x32x128xf32> to vector<32x128xf32>
    %51 = vector.shape_cast %48 : vector<32x128xf32> to vector<1x32x128xf32>
    tpu.vector_store %arg4[%c0_16, %c0_17, %c0_18], %51 {strides = array<i32>} : memref<1x32x128xf32, #tpu.memory_space<vmem>>, vector<1x32x128xf32>,
    return
  }
  func.func @transform_0(%arg0: i32) -> (i32, i32, i32) {
    %c0_i32 = arith.constant 0 : i32
    %c0_i32_0 = arith.constant 0 : i32
    %c0_i32_1 = arith.constant 0 : i32
    return %arg0, %c0_i32, %c0_i32_0 : i32, i32, i32
  }
  func.func @transform_1(%arg0: i32) -> (i32, i32) {
    %c0_i32 = arith.constant 0 : i32
    %c0_i32_0 = arith.constant 0 : i32
    %c0_i32_1 = arith.constant 0 : i32
    return %c0_i32, %c0_i32_0 : i32, i32
  }
  func.func @transform_2(%arg0: i32) -> (i32, i32) {
    %c0_i32 = arith.constant 0 : i32
    %c0_i32_0 = arith.constant 0 : i32
    %c0_i32_1 = arith.constant 0 : i32
    return %c0_i32, %c0_i32_0 : i32, i32
  }
  func.func @transform_3(%arg0: i32) -> (i32, i32, i32) {
    %c0_i32 = arith.constant 0 : i32
    %c0_i32_0 = arith.constant 0 : i32
    %c0_i32_1 = arith.constant 0 : i32
    return %arg0, %c0_i32, %c0_i32_0 : i32, i32, i32
  }
}

</mosaic_0001>

<llo_original>
// kernel: tpu_custom_call.1
$region0: #{tpu_custom_call.1}
  #allocation0 [shape = 'u32[]', space=smem, size = 0x4, offset = 0x4, fixed_abs, tag = 'smem constant byte address 0x4 - core index']
  #allocation1 [shape = 'u32[72,128]{1,0:T(1,128)}', space=vmem, size = 0x9000, scoped, tag = 'internal scratch']
  %s0 = inlined_call_operand.vmem [shape: f32[1,96,128], index: 0, kind: input, shape index: {}]
  %s1 = inlined_call_operand.hbm [shape: f32[96,96], index: 1, kind: input, shape index: {}]
  %s2 = inlined_call_operand.vmem [shape: f32[96,1], index: 2, kind: input, shape index: {}]
  %s3 = inlined_call_operand.hbm [shape: f32[1,32,128], index: 3, kind: output, shape index: {}]
  %s4 = sld [smem:[#allocation0]]
  $region26: #{tpu_custom_call.1} parent=0
    _
  %s6 = ssub.s32 1, %s4
  %s7 = scalar_select 0, %s6, %s4
  $region1: #{tpu_custom_call.1} parent=0
    #allocation2 [shape = 'u8[49152]{0}', space=vmem, size = 0xc000, scoped, tag = 'input window, operand 1, single buffered']
    #allocation3 [shape = 's32[1]{0}', space=sflag, size = 0x4, scoped, tag = 'scoped memory for tpu_custom_call.1']
    #allocation4 [shape = 's32[1]{0}', space=sflag, size = 0x4, scoped, tag = 'scoped memory for tpu_custom_call.1']
    #allocation5 [shape = 'u8[16384]{0}', space=vmem, size = 0x4000, scoped, tag = 'output window, operand 0, single buffered']
    %8 = vsyncpa [#allocation3], 0
    %9 = vsyncpa [#allocation4], 0
    // Predicated region
    $region2: #{tpu_custom_call.1} parent=1 // pred_check
      _
    $region3: #{tpu_custom_call.1} parent=1 // pred_check_branch
      %11 = sbr.rel (0) target = $region5
    $region4: #{tpu_custom_call.1} parent=1 // pred_region
      _
    $region5: #{tpu_custom_call.1} parent=1 // pred_fallthru
      _
    // Predicated region
    $region6: #{tpu_custom_call.1} parent=1 // pred_check
      _
    $region7: #{tpu_custom_call.1} parent=1 // pred_check_branch
      %13 = sbr.rel (0) target = $region9
    $region8: #{tpu_custom_call.1} parent=1 // pred_region
      %15 = vsyncadd [#allocation3], 0
      %s16 = sshll.u32 %s1, 4
      %s17 = int_to_ptr.hbm [resolvable:$true] %s16
      %s18 = sshll.u32 [#allocation2], 4
      %s19 = int_to_ptr.vmem [resolvable:$true] %s18
      %24 = dma.hbm_to_vmem [thread:$0]  %s17, 1536, %s19, [#allocation3], 128, 128, 8
    $region9: #{tpu_custom_call.1} parent=1 // pred_fallthru
      _
    // Predicated region
    $region10: #{tpu_custom_call.1} parent=1 // pred_check
      _
    $region11: #{tpu_custom_call.1} parent=1 // pred_check_branch
      %26 = sbr.rel (0) target = $region13
    $region12: #{tpu_custom_call.1} parent=1 // pred_region
      _
    $region13: #{tpu_custom_call.1} parent=1 // pred_fallthru
      _
    // Predicated region
    $region14: #{tpu_custom_call.1} parent=1 // pred_check
      _
    $region15: #{tpu_custom_call.1} parent=1 // pred_check_branch
      %28 = sbr.rel (0) target = $region17
    $region16: #{tpu_custom_call.1} parent=1 // pred_region
      %30 = dma.done [#allocation3], 1536
    $region17: #{tpu_custom_call.1} parent=1 // pred_fallthru
      _
    %v31 = vld [vmem:[#allocation2] sm:$0xff]
    %v32 = vld [vmem:[#allocation2 + $0x8] sm:$0xff]
    %v33 = vld [vmem:[#allocation2 + $0x10] sm:$0xff]
    %v34 = vld [vmem:[#allocation2 + $0x18] sm:$0xff]
    %v35 = vld [vmem:[#allocation2 + $0x20] sm:$0xff]
    %v36 = vld [vmem:[#allocation2 + $0x28] sm:$0xff]
    %v37 = vld [vmem:[#allocation2 + $0x30] sm:$0xff]
    %v38 = vld [vmem:[#allocation2 + $0x38] sm:$0xff]
    %v39 = vld [vmem:[#allocation2 + $0x40] sm:$0xff]
    %v40 = vld [vmem:[#allocation2 + $0x48] sm:$0xff]
    %v41 = vld [vmem:[#allocation2 + $0x50] sm:$0xff]
    %v42 = vld [vmem:[#allocation2 + $0x58] sm:$0xff]
    %v43 = vld [vmem:[%s2] sm:$0xff]
    %v44 = vld [vmem:[%s2 + $0x8] sm:$0xff]
    %v45 = vld [vmem:[%s2 + $0x10] sm:$0xff]
    %v46 = vld [vmem:[%s2 + $0x18] sm:$0xff]
    %v47 = vld [vmem:[%s2 + $0x20] sm:$0xff]
    %v48 = vld [vmem:[%s2 + $0x28] sm:$0xff]
    %v49 = vld [vmem:[%s2 + $0x30] sm:$0xff]
    %v50 = vld [vmem:[%s2 + $0x38] sm:$0xff]
    %v51 = vld [vmem:[%s2 + $0x40] sm:$0xff]
    %v52 = vld [vmem:[%s2 + $0x48] sm:$0xff]
    %v53 = vld [vmem:[%s2 + $0x50] sm:$0xff]
    %v54 = vld [vmem:[%s2 + $0x58] sm:$0xff]
    %v55 = vld [vmem:[%s0] sm:$0xff]
    %v56 = vld [vmem:[%s0 + $0x8] sm:$0xff]
    %v57 = vld [vmem:[%s0 + $0x10] sm:$0xff]
    %v58 = vld [vmem:[%s0 + $0x18] sm:$0xff]
    %v59 = vld [vmem:[%s0 + $0x20] sm:$0xff]
    %v60 = vld [vmem:[%s0 + $0x28] sm:$0xff]
    %v61 = vld [vmem:[%s0 + $0x30] sm:$0xff]
    %v62 = vld [vmem:[%s0 + $0x38] sm:$0xff]
    %v63 = vld [vmem:[%s0 + $0x40] sm:$0xff]
    %v64 = vld [vmem:[%s0 + $0x48] sm:$0xff]
    %v65 = vld [vmem:[%s0 + $0x50] sm:$0xff]
    %v66 = vld [vmem:[%s0 + $0x58] sm:$0xff]
    %68 = vset.pattern.permute.xlu0 0
    %69 = vperm.xlu0 %68, %v43
    %v70 = vpop.permute.xlu0 %69
    %73 = vset.pattern.permute.xlu0 0
    %74 = vperm.xlu0 %73, %v44
    %v75 = vpop.permute.xlu0 %74
    %78 = vset.pattern.permute.xlu0 0
    %79 = vperm.xlu0 %78, %v45
    %v80 = vpop.permute.xlu0 %79
    %83 = vset.pattern.permute.xlu0 0
    %84 = vperm.xlu0 %83, %v46
    %v85 = vpop.permute.xlu0 %84
    %88 = vset.pattern.permute.xlu0 0
    %89 = vperm.xlu0 %88, %v47
    %v90 = vpop.permute.xlu0 %89
    %93 = vset.pattern.permute.xlu0 0
    %94 = vperm.xlu0 %93, %v48
    %v95 = vpop.permute.xlu0 %94
    %98 = vset.pattern.permute.xlu0 0
    %99 = vperm.xlu0 %98, %v49
    %v100 = vpop.permute.xlu0 %99
    %103 = vset.pattern.permute.xlu0 0
    %104 = vperm.xlu0 %103, %v50
    %v105 = vpop.permute.xlu0 %104
    %108 = vset.pattern.permute.xlu0 0
    %109 = vperm.xlu0 %108, %v51
    %v110 = vpop.permute.xlu0 %109
    %113 = vset.pattern.permute.xlu0 0
    %114 = vperm.xlu0 %113, %v52
    %v115 = vpop.permute.xlu0 %114
    %118 = vset.pattern.permute.xlu0 0
    %119 = vperm.xlu0 %118, %v53
    %v120 = vpop.permute.xlu0 %119
    %123 = vset.pattern.permute.xlu0 0
    %124 = vperm.xlu0 %123, %v54
    %v125 = vpop.permute.xlu0 %124
    %vm127 = vcmask 785408
    %v129 = vsel %vm127, %v31, 0
    %v132 = vsel %vm127, %v32, 0
    %v135 = vsel %vm127, %v33, 0
    %v138 = vsel %vm127, %v34, 0
    %v141 = vsel %vm127, %v35, 0
    %v144 = vsel %vm127, %v36, 0
    %v147 = vsel %vm127, %v37, 0
    %v150 = vsel %vm127, %v38, 0
    %v153 = vsel %vm127, %v39, 0
    %v156 = vsel %vm127, %v40, 0
    %v159 = vsel %vm127, %v41, 0
    %v162 = vsel %vm127, %v42, 0
    %164 = vmatpush.msra.mxu0 0.0
    %165 = vmatpush.msra.mxu0 0.0
    %166 = vmatpush.msra.mxu0 0.0
    %167 = vmatpush.msra.mxu0 0.0
    %168 = vmatpush.msra.mxu0 %v66
    %169 = vmatpush.msra.mxu0 %v65
    %170 = vmatpush.msra.mxu0 %v64
    %171 = vmatpush.msra.mxu0 %v63
    %172 = vmatpush.msra.mxu0 %v62
    %173 = vmatpush.msra.mxu0 %v61
    %174 = vmatpush.msra.mxu0 %v60
    %175 = vmatpush.msra.mxu0 %v59
    %176 = vmatpush.msra.mxu0 %v58
    %177 = vmatpush.msra.mxu0 %v57
    %178 = vmatpush.msra.mxu0 %v56
    %179 = vmatpush.msra.mxu0 %v55
    %180 = vmatmul.f32.gmra.mxu0 %v129
    %v181 = vpop.f32.mrf.mxu0
    %v182 = vadd.f32 %v70, %v181
    %183 = vmatmul.f32.gmra.mxu0 %v132
    %v184 = vpop.f32.mrf.mxu0
    %v185 = vadd.f32 %v75, %v184
    %186 = vmatmul.f32.gmra.mxu0 %v135
    %v187 = vpop.f32.mrf.mxu0
    %v188 = vadd.f32 %v80, %v187
    %189 = vmatmul.f32.gmra.mxu0 %v138
    %v190 = vpop.f32.mrf.mxu0
    %v191 = vadd.f32 %v85, %v190
    %192 = vmatmul.f32.gmra.mxu0 %v141
    %v193 = vpop.f32.mrf.mxu0
    %v194 = vadd.f32 %v90, %v193
    %195 = vmatmul.f32.gmra.mxu0 %v144
    %v196 = vpop.f32.mrf.mxu0
    %v197 = vadd.f32 %v95, %v196
    %198 = vmatmul.f32.gmra.mxu0 %v147
    %v199 = vpop.f32.mrf.mxu0
    %v200 = vadd.f32 %v100, %v199
    %201 = vmatmul.f32.gmra.mxu0 %v150
    %v202 = vpop.f32.mrf.mxu0
    %v203 = vadd.f32 %v105, %v202
    %204 = vmatmul.f32.gmra.mxu0 %v153
    %v205 = vpop.f32.mrf.mxu0
    %v206 = vadd.f32 %v110, %v205
    %207 = vmatmul.f32.gmra.mxu0 %v156
    %v208 = vpop.f32.mrf.mxu0
    %v209 = vadd.f32 %v115, %v208
    %210 = vmatmul.f32.gmra.mxu0 %v159
    %v211 = vpop.f32.mrf.mxu0
    %v212 = vadd.f32 %v120, %v211
    %213 = vmatmul.f32.gmra.mxu0 %v162
    %v214 = vpop.f32.mrf.mxu0
    %v215 = vadd.f32 %v125, %v214
    %216 = vdwg.mxu0
    %217 = vxpose.xlu0.b32.start [1/16] %v194, 128
    %218 = vxpose.xlu0.b32.cont [2/16] %v197, 128
    %219 = vxpose.xlu0.b32.cont [3/16] %v200, 128
    %220 = vxpose.xlu0.b32.cont [4/16] %v203, 128
    %221 = vxpose.xlu0.b32.cont [5/16] 0.0, 128
    %222 = vxpose.xlu0.b32.cont [6/16] 0.0, 128
    %223 = vxpose.xlu0.b32.cont [7/16] 0.0, 128
    %224 = vxpose.xlu0.b32.cont [8/16] 0.0, 128
    %225 = vxpose.xlu0.b32.cont [9/16] 0.0, 128
    %226 = vxpose.xlu0.b32.cont [10/16] 0.0, 128
    %227 = vxpose.xlu0.b32.cont [11/16] 0.0, 128
    %228 = vxpose.xlu0.b32.cont [12/16] 0.0, 128
    %229 = vxpose.xlu0.b32.cont [13/16] 0.0, 128
    %230 = vxpose.xlu0.b32.cont [14/16] 0.0, 128
    %231 = vxpose.xlu0.b32.cont [15/16] 0.0, 128
    %232 = vxpose.xlu0.b32.end [16/16] 0.0, 128
    %v233 = vpop.trf.xlu0
    %v234 = vpop.trf.xlu0
    %v235 = vpop.trf.xlu0
    %v236 = vpop.trf.xlu0
    %v237 = vpop.trf.xlu0
    %v238 = vpop.trf.xlu0
    %v239 = vpop.trf.xlu0
    %v240 = vpop.trf.xlu0
    %v241 = vpop.trf.xlu0
    %v242 = vpop.trf.xlu0
    %v243 = vpop.trf.xlu0
    %v244 = vpop.trf.xlu0
    %v245 = vpop.trf.xlu0
    %v246 = vpop.trf.xlu0
    %v247 = vpop.trf.xlu0
    %v248 = vpop.trf.xlu0
    %vm249 = vcmask 261120
    %v251 = vsel %vm249, %v233, 0
    %v254 = vsel %vm249, %v234, 0
    %v257 = vsel %vm249, %v235, 0
    %v260 = vsel %vm249, %v236, 0
    %v263 = vsel %vm249, %v237, 0
    %v266 = vsel %vm249, %v238, 0
    %v269 = vsel %vm249, %v239, 0
    %v272 = vsel %vm249, %v240, 0
    %274 = vmatpush.msra.mxu0 0.0
    %275 = vmatpush.msra.mxu0 0.0
    %276 = vmatpush.msra.mxu0 0.0
    %277 = vmatpush.msra.mxu0 0.0
    %278 = vmatpush.msra.mxu0 0.0
    %279 = vmatpush.msra.mxu0 0.0
    %280 = vmatpush.msra.mxu0 0.0
    %281 = vmatpush.msra.mxu0 0.0
    %282 = vmatpush.msra.mxu0 0.0
    %283 = vmatpush.msra.mxu0 0.0
    %284 = vmatpush.msra.mxu0 0.0
    %285 = vmatpush.msra.mxu0 0.0
    %286 = vmatpush.msra.mxu0 %v191
    %287 = vmatpush.msra.mxu0 %v188
    %288 = vmatpush.msra.mxu0 %v185
    %289 = vmatpush.msra.mxu0 %v182
    %290 = vmatmul.f32.gmra.mxu0 %v251
    %v291 = vpop.f32.mrf.mxu0
    %v292 = vadd.f32 0.0, %v291
    %293 = vmatmul.f32.gmra.mxu0 %v254
    %v294 = vpop.f32.mrf.mxu0
    %v295 = vadd.f32 0.0, %v294
    %296 = vmatmul.f32.gmra.mxu0 %v257
    %v297 = vpop.f32.mrf.mxu0
    %v298 = vadd.f32 0.0, %v297
    %299 = vmatmul.f32.gmra.mxu0 %v260
    %v300 = vpop.f32.mrf.mxu0
    %v301 = vadd.f32 0.0, %v300
    %302 = vmatmul.f32.gmra.mxu0 %v263
    %v303 = vpop.f32.mrf.mxu0
    %v304 = vadd.f32 0.0, %v303
    %305 = vmatmul.f32.gmra.mxu0 %v266
    %v306 = vpop.f32.mrf.mxu0
    %v307 = vadd.f32 0.0, %v306
    %308 = vmatmul.f32.gmra.mxu0 %v269
    %v309 = vpop.f32.mrf.mxu0
    %v310 = vadd.f32 0.0, %v309
    %311 = vmatmul.f32.gmra.mxu0 %v272
    %v312 = vpop.f32.mrf.mxu0
    %v313 = vadd.f32 0.0, %v312
    %314 = vdwg.mxu0
    %vm315 = vcmask 523264
    %v316 = vsel %vm315, %v292, -inf
    %v317 = vsel %vm315, %v295, -inf
    %v318 = vsel %vm315, %v298, -inf
    %v319 = vsel %vm315, %v301, -inf
    %v320 = vsel %vm315, %v304, -inf
    %v321 = vmax.f32 %v316, %v320
    %v322 = vsel %vm315, %v307, -inf
    %v323 = vmax.f32 %v317, %v322
    %v324 = vsel %vm315, %v310, -inf
    %v325 = vmax.f32 %v318, %v324
    %v326 = vsel %vm315, %v313, -inf
    %v327 = vmax.f32 %v319, %v326
    %v328 = vmax.f32 %v321, %v323
    %v329 = vmax.f32 %v325, %v327
    %v330 = vmax.f32 %v328, %v329
    %v331 = vrot.slane %v330, 4
    %v332 = vmax.f32 %v330, %v331
    %v333 = vrot.slane %v332, 2
    %v334 = vmax.f32 %v332, %v333
    %v335 = vrot.slane %v334, 1
    %v336 = vmax.f32 %v334, %v335
    %v337 = vsub.f32 %v292, %v336
    %v338 = vsub.f32 %v295, %v336
    %v339 = vsub.f32 %v298, %v336
    %v340 = vsub.f32 %v301, %v336
    %v341 = vsub.f32 %v304, %v336
    %v342 = vsub.f32 %v307, %v336
    %v343 = vsub.f32 %v310, %v336
    %v344 = vsub.f32 %v313, %v336
    %v345 = vmul.f32 %v337, 1.442695
    %v346 = vpow.pop %v345
    %v347 = vmul.f32 %v338, 1.442695
    %v348 = vpow.pop %v347
    %v349 = vmul.f32 %v339, 1.442695
    %v350 = vpow.pop %v349
    %v351 = vmul.f32 %v340, 1.442695
    %v352 = vpow.pop %v351
    %v353 = vmul.f32 %v341, 1.442695
    %v354 = vpow.pop %v353
    %v355 = vmul.f32 %v342, 1.442695
    %v356 = vpow.pop %v355
    %v357 = vmul.f32 %v343, 1.442695
    %v358 = vpow.pop %v357
    %v359 = vmul.f32 %v344, 1.442695
    %v360 = vpow.pop %v359
    %v361 = vsel %vm315, %v346, 0.0
    %v362 = vsel %vm315, %v348, 0.0
    %v363 = vadd.f32 %v361, %v362
    %v364 = vsel %vm315, %v350, 0.0
    %v365 = vadd.f32 %v363, %v364
    %v366 = vsel %vm315, %v352, 0.0
    %v367 = vadd.f32 %v365, %v366
    %v368 = vsel %vm315, %v354, 0.0
    %v369 = vadd.f32 %v367, %v368
    %v370 = vsel %vm315, %v356, 0.0
    %v371 = vadd.f32 %v369, %v370
    %v372 = vsel %vm315, %v358, 0.0
    %v373 = vadd.f32 %v371, %v372
    %v374 = vsel %vm315, %v360, 0.0
    %v375 = vadd.f32 %v373, %v374
    %v376 = vrot.slane %v375, 4
    %v377 = vadd.f32 %v375, %v376
    %v378 = vrot.slane %v377, 2
    %v379 = vadd.f32 %v377, %v378
    %v380 = vrot.slane %v379, 1
    %v381 = vadd.f32 %v379, %v380
    %v383 = vsel %vm315, %v206, 0
    %v386 = vsel %vm315, %v209, 0
    %v389 = vsel %vm315, %v212, 0
    %v392 = vsel %vm315, %v215, 0
    %394 = vmatpush.msra.mxu0 0.0
    %395 = vmatpush.msra.mxu0 0.0
    %396 = vmatpush.msra.mxu0 0.0
    %397 = vmatpush.msra.mxu0 0.0
    %398 = vmatpush.msra.mxu0 0.0
    %399 = vmatpush.msra.mxu0 0.0
    %400 = vmatpush.msra.mxu0 0.0
    %401 = vmatpush.msra.mxu0 0.0
    %402 = vmatpush.msra.mxu0 %v360
    %403 = vmatpush.msra.mxu0 %v358
    %404 = vmatpush.msra.mxu0 %v356
    %405 = vmatpush.msra.mxu0 %v354
    %406 = vmatpush.msra.mxu0 %v352
    %407 = vmatpush.msra.mxu0 %v350
    %408 = vmatpush.msra.mxu0 %v348
    %409 = vmatpush.msra.mxu0 %v346
    %410 = vmatmul.f32.gmra.mxu0 %v383
    %v411 = vpop.f32.mrf.mxu0
    %v412 = vadd.f32 0.0, %v411
    %413 = vmatmul.f32.gmra.mxu0 %v386
    %v414 = vpop.f32.mrf.mxu0
    %v415 = vadd.f32 0.0, %v414
    %416 = vmatmul.f32.gmra.mxu0 %v389
    %v417 = vpop.f32.mrf.mxu0
    %v418 = vadd.f32 0.0, %v417
    %419 = vmatmul.f32.gmra.mxu0 %v392
    %v420 = vpop.f32.mrf.mxu0
    %v421 = vadd.f32 0.0, %v420
    %422 = vdwg.mxu0
    %v423 = vrcp.pop %v381
    %v424 = vmul.f32 %v381, %v423
    %v425 = vsub.f32 2.0, %v424
    %v426 = vmul.f32 %v423, %v425
    %v427 = vmul.f32 %v412, %v426
    %v428 = vmul.f32 %v415, %v426
    %v429 = vmul.f32 %v418, %v426
    %v430 = vmul.f32 %v421, %v426
    %435 = vrot.lane.b32.xlu0 %v194, 64
    %v436 = vpop.permute.xlu0 %435
    %437 = vrot.lane.b32.xlu0 %v197, 64
    %v438 = vpop.permute.xlu0 %437
    %439 = vrot.lane.b32.xlu0 %v200, 64
    %v440 = vpop.permute.xlu0 %439
    %441 = vrot.lane.b32.xlu0 %v203, 64
    %v442 = vpop.permute.xlu0 %441
    %447 = vxpose.xlu0.b32.start [1/16] %v436, 128
    %448 = vxpose.xlu0.b32.cont [2/16] %v438, 128
    %449 = vxpose.xlu0.b32.cont [3/16] %v440, 128
    %450 = vxpose.xlu0.b32.cont [4/16] %v442, 128
    %451 = vxpose.xlu0.b32.cont [5/16] 0.0, 128
    %452 = vxpose.xlu0.b32.cont [6/16] 0.0, 128
    %453 = vxpose.xlu0.b32.cont [7/16] 0.0, 128
    %454 = vxpose.xlu0.b32.cont [8/16] 0.0, 128
    %455 = vxpose.xlu0.b32.cont [9/16] 0.0, 128
    %456 = vxpose.xlu0.b32.cont [10/16] 0.0, 128
    %457 = vxpose.xlu0.b32.cont [11/16] 0.0, 128
    %458 = vxpose.xlu0.b32.cont [12/16] 0.0, 128
    %459 = vxpose.xlu0.b32.cont [13/16] 0.0, 128
    %460 = vxpose.xlu0.b32.cont [14/16] 0.0, 128
    %461 = vxpose.xlu0.b32.cont [15/16] 0.0, 128
    %462 = vxpose.xlu0.b32.end [16/16] 0.0, 128
    %v463 = vpop.trf.xlu0
    %v464 = vpop.trf.xlu0
    %v465 = vpop.trf.xlu0
    %v466 = vpop.trf.xlu0
    %v467 = vpop.trf.xlu0
    %v468 = vpop.trf.xlu0
    %v469 = vpop.trf.xlu0
    %v470 = vpop.trf.xlu0
    %v471 = vpop.trf.xlu0
    %v472 = vpop.trf.xlu0
    %v473 = vpop.trf.xlu0
    %v474 = vpop.trf.xlu0
    %v475 = vpop.trf.xlu0
    %v476 = vpop.trf.xlu0
    %v477 = vpop.trf.xlu0
    %v478 = vpop.trf.xlu0
    %483 = vrot.lane.b32.xlu0 %v182, 64
    %v484 = vpop.permute.xlu0 %483
    %485 = vrot.lane.b32.xlu0 %v185, 64
    %v486 = vpop.permute.xlu0 %485
    %487 = vrot.lane.b32.xlu0 %v188, 64
    %v488 = vpop.permute.xlu0 %487
    %489 = vrot.lane.b32.xlu0 %v191, 64
    %v490 = vpop.permute.xlu0 %489
    %v496 = vsel %vm249, %v463, 0
    %v499 = vsel %vm249, %v464, 0
    %v502 = vsel %vm249, %v465, 0
    %v505 = vsel %vm249, %v466, 0
    %v508 = vsel %vm249, %v467, 0
    %v511 = vsel %vm249, %v468, 0
    %v514 = vsel %vm249, %v469, 0
    %v517 = vsel %vm249, %v470, 0
    %519 = vmatpush.msra.mxu0 0.0
    %520 = vmatpush.msra.mxu0 0.0
    %521 = vmatpush.msra.mxu0 0.0
    %522 = vmatpush.msra.mxu0 0.0
    %523 = vmatpush.msra.mxu0 0.0
    %524 = vmatpush.msra.mxu0 0.0
    %525 = vmatpush.msra.mxu0 0.0
    %526 = vmatpush.msra.mxu0 0.0
    %527 = vmatpush.msra.mxu0 0.0
    %528 = vmatpush.msra.mxu0 0.0
    %529 = vmatpush.msra.mxu0 0.0
    %530 = vmatpush.msra.mxu0 0.0
    %531 = vmatpush.msra.mxu0 %v490
    %532 = vmatpush.msra.mxu0 %v488
    %533 = vmatpush.msra.mxu0 %v486
    %534 = vmatpush.msra.mxu0 %v484
    %535 = vmatmul.f32.gmra.mxu0 %v496
    %v536 = vpop.f32.mrf.mxu0
    %v537 = vadd.f32 0.0, %v536
    %538 = vmatmul.f32.gmra.mxu0 %v499
    %v539 = vpop.f32.mrf.mxu0
    %v540 = vadd.f32 0.0, %v539
    %541 = vmatmul.f32.gmra.mxu0 %v502
    %v542 = vpop.f32.mrf.mxu0
    %v543 = vadd.f32 0.0, %v542
    %544 = vmatmul.f32.gmra.mxu0 %v505
    %v545 = vpop.f32.mrf.mxu0
    %v546 = vadd.f32 0.0, %v545
    %547 = vmatmul.f32.gmra.mxu0 %v508
    %v548 = vpop.f32.mrf.mxu0
    %v549 = vadd.f32 0.0, %v548
    %550 = vmatmul.f32.gmra.mxu0 %v511
    %v551 = vpop.f32.mrf.mxu0
    %v552 = vadd.f32 0.0, %v551
    %553 = vmatmul.f32.gmra.mxu0 %v514
    %v554 = vpop.f32.mrf.mxu0
    %v555 = vadd.f32 0.0, %v554
    %556 = vmatmul.f32.gmra.mxu0 %v517
    %v557 = vpop.f32.mrf.mxu0
    %v558 = vadd.f32 0.0, %v557
    %559 = vdwg.mxu0
    %v560 = vsel %vm315, %v537, -inf
    %v561 = vsel %vm315, %v540, -inf
    %v562 = vsel %vm315, %v543, -inf
    %v563 = vsel %vm315, %v546, -inf
    %v564 = vsel %vm315, %v549, -inf
    %v565 = vmax.f32 %v560, %v564
    %v566 = vsel %vm315, %v552, -inf
    %v567 = vmax.f32 %v561, %v566
    %v568 = vsel %vm315, %v555, -inf
    %v569 = vmax.f32 %v562, %v568
    %v570 = vsel %vm315, %v558, -inf
    %v571 = vmax.f32 %v563, %v570
    %v572 = vmax.f32 %v565, %v567
    %v573 = vmax.f32 %v569, %v571
    %v574 = vmax.f32 %v572, %v573
    %v575 = vrot.slane %v574, 4
    %v576 = vmax.f32 %v574, %v575
    %v577 = vrot.slane %v576, 2
    %v578 = vmax.f32 %v576, %v577
    %v579 = vrot.slane %v578, 1
    %v580 = vmax.f32 %v578, %v579
    %v581 = vsub.f32 %v537, %v580
    %v582 = vsub.f32 %v540, %v580
    %v583 = vsub.f32 %v543, %v580
    %v584 = vsub.f32 %v546, %v580
    %v585 = vsub.f32 %v549, %v580
    %v586 = vsub.f32 %v552, %v580
    %v587 = vsub.f32 %v555, %v580
    %v588 = vsub.f32 %v558, %v580
    %v589 = vmul.f32 %v581, 1.442695
    %v590 = vpow.pop %v589
    %v591 = vmul.f32 %v582, 1.442695
    %v592 = vpow.pop %v591
    %v593 = vmul.f32 %v583, 1.442695
    %v594 = vpow.pop %v593
    %v595 = vmul.f32 %v584, 1.442695
    %v596 = vpow.pop %v595
    %v597 = vmul.f32 %v585, 1.442695
    %v598 = vpow.pop %v597
    %v599 = vmul.f32 %v586, 1.442695
    %v600 = vpow.pop %v599
    %v601 = vmul.f32 %v587, 1.442695
    %v602 = vpow.pop %v601
    %v603 = vmul.f32 %v588, 1.442695
    %v604 = vpow.pop %v603
    %v605 = vsel %vm315, %v590, 0.0
    %v606 = vsel %vm315, %v592, 0.0
    %v607 = vadd.f32 %v605, %v606
    %v608 = vsel %vm315, %v594, 0.0
    %v609 = vadd.f32 %v607, %v608
    %v610 = vsel %vm315, %v596, 0.0
    %v611 = vadd.f32 %v609, %v610
    %v612 = vsel %vm315, %v598, 0.0
    %v613 = vadd.f32 %v611, %v612
    %v614 = vsel %vm315, %v600, 0.0
    %v615 = vadd.f32 %v613, %v614
    %v616 = vsel %vm315, %v602, 0.0
    %v617 = vadd.f32 %v615, %v616
    %v618 = vsel %vm315, %v604, 0.0
    %v619 = vadd.f32 %v617, %v618
    %v620 = vrot.slane %v619, 4
    %v621 = vadd.f32 %v619, %v620
    %v622 = vrot.slane %v621, 2
    %v623 = vadd.f32 %v621, %v622
    %v624 = vrot.slane %v623, 1
    %v625 = vadd.f32 %v623, %v624
    %626 = vrot.lane.b32.xlu0 %v206, 64
    %v627 = vpop.permute.xlu0 %626
    %628 = vrot.lane.b32.xlu0 %v209, 64
    %v629 = vpop.permute.xlu0 %628
    %630 = vrot.lane.b32.xlu0 %v212, 64
    %v631 = vpop.permute.xlu0 %630
    %632 = vrot.lane.b32.xlu0 %v215, 64
    %v633 = vpop.permute.xlu0 %632
    %v634 = vsel %vm315, %v627, 0
    %v636 = vsel %vm315, %v629, 0
    %v638 = vsel %vm315, %v631, 0
    %v640 = vsel %vm315, %v633, 0
    %642 = vmatpush.msra.mxu0 0.0
    %643 = vmatpush.msra.mxu0 0.0
    %644 = vmatpush.msra.mxu0 0.0
    %645 = vmatpush.msra.mxu0 0.0
    %646 = vmatpush.msra.mxu0 0.0
    %647 = vmatpush.msra.mxu0 0.0
    %648 = vmatpush.msra.mxu0 0.0
    %649 = vmatpush.msra.mxu0 0.0
    %650 = vmatpush.msra.mxu0 %v604
    %651 = vmatpush.msra.mxu0 %v602
    %652 = vmatpush.msra.mxu0 %v600
    %653 = vmatpush.msra.mxu0 %v598
    %654 = vmatpush.msra.mxu0 %v596
    %655 = vmatpush.msra.mxu0 %v594
    %656 = vmatpush.msra.mxu0 %v592
    %657 = vmatpush.msra.mxu0 %v590
    %658 = vmatmul.f32.gmra.mxu0 %v634
    %v659 = vpop.f32.mrf.mxu0
    %v660 = vadd.f32 0.0, %v659
    %661 = vmatmul.f32.gmra.mxu0 %v636
    %v662 = vpop.f32.mrf.mxu0
    %v663 = vadd.f32 0.0, %v662
    %664 = vmatmul.f32.gmra.mxu0 %v638
    %v665 = vpop.f32.mrf.mxu0
    %v666 = vadd.f32 0.0, %v665
    %667 = vmatmul.f32.gmra.mxu0 %v640
    %v668 = vpop.f32.mrf.mxu0
    %v669 = vadd.f32 0.0, %v668
    %670 = vdwg.mxu0
    %v671 = vrcp.pop %v625
    %v672 = vmul.f32 %v625, %v671
    %v673 = vsub.f32 2.0, %v672
    %v674 = vmul.f32 %v671, %v673
    %v675 = vmul.f32 %v660, %v674
    %v676 = vmul.f32 %v663, %v674
    %v677 = vmul.f32 %v666, %v674
    %v678 = vmul.f32 %v669, %v674
    %683 = vrot.lane.b32.xlu0 %v675, 64
    %v684 = vpop.permute.xlu0 %683
    %685 = vrot.lane.b32.xlu0 %v676, 64
    %v686 = vpop.permute.xlu0 %685
    %687 = vrot.lane.b32.xlu0 %v677, 64
    %v688 = vpop.permute.xlu0 %687
    %689 = vrot.lane.b32.xlu0 %v678, 64
    %v690 = vpop.permute.xlu0 %689
    %v695 = vsel %vm315, %v427, %v684
    %v696 = vsel %vm315, %v428, %v686
    %v697 = vsel %vm315, %v429, %v688
    %v698 = vsel %vm315, %v430, %v690
    %699 = vst [vmem:[#allocation5] sm:$0xff] %v695
    %700 = vst [vmem:[#allocation5 + $0x8] sm:$0xff] %v696
    %701 = vst [vmem:[#allocation5 + $0x10] sm:$0xff] %v697
    %702 = vst [vmem:[#allocation5 + $0x18] sm:$0xff] %v698
    // Predicated region
    $region18: #{tpu_custom_call.1} parent=1 // pred_check
      _
    $region19: #{tpu_custom_call.1} parent=1 // pred_check_branch
      %704 = sbr.rel (0) target = $region21
    $region20: #{tpu_custom_call.1} parent=1 // pred_region
      %706 = vsyncadd [#allocation4], 0
      %s707 = sshll.u32 [#allocation5], 4
      %s708 = int_to_ptr.vmem [resolvable:$true] %s707
      %s709 = sshll.u32 %s3, 4
      %s710 = int_to_ptr.hbm [resolvable:$true] %s709
      %715 = dma.vmem_to_hbm [thread:$0]  %s708, 512, %s710, [#allocation4], 128, 128, 8
    $region21: #{tpu_custom_call.1} parent=1 // pred_fallthru
      _
    // Predicated region
    $region22: #{tpu_custom_call.1} parent=1 // pred_check
      _
    $region23: #{tpu_custom_call.1} parent=1 // pred_check_branch
      %717 = sbr.rel (0) target = $region25
    $region24: #{tpu_custom_call.1} parent=1 // pred_region
      %719 = dma.done [#allocation4], 512
    $region25: #{tpu_custom_call.1} parent=1 // pred_fallthru
      _
    %720 = vsyncpa [#allocation3], 1
    %721 = vsyncpa [#allocation4], 1

</llo_original>
